<compile_context>
chip_gen: v7x
topology: tpu7x:2x2x1
jax: 0.10.0
libtpu: 0.0.40
codegen_flags: <defaults>
</compile_context>

<pallas_src>
import functools

import jax
import jax.numpy as jnp
from jax.experimental import pallas as pl
from jax.experimental.pallas import tpu as pltpu

_MIB = 1 << 20


def _pick_tile(dim, preferred):
    """Largest tile in `preferred` that evenly divides `dim` (else the full dim)."""
    for t in preferred:
        if dim >= t and dim % t == 0:
            return t
    return dim


def _split_if_single_point(row_tile, rows, n_other_parallel_tiles):
    """If the parallel part of the grid would be a single point, halve the row tile
    so v7x's second TensorCore gets a grid point (one extra ~0.35us grid step on
    single-TC chips, negligible).  Keeps the sublane (8) alignment."""
    if rows // row_tile * n_other_parallel_tiles == 1 and rows >= 16 and rows % 16 == 0:
        return rows // 2
    return row_tile


def _vmem_limit(footprint_bytes):
    """Scoped-VMEM cap sized from the real block footprint, with margin.
    Capped at 48 MiB so it stays inside v7x's 64 MiB physical VMEM."""
    return int(min(max(footprint_bytes + 16 * _MIB, 32 * _MIB), 48 * _MIB))


def _mix_kernel(w_ref, ops_ref, hmix_ref, *, num_ops):
    """hmix_tile = sum_k relu(w_k) * H_k_tile, accumulated in f32.

    w_ref:    SMEM [K]          relu'd architecture weights (scalar prefetch)
    ops_ref:  VMEM [K, tn, td]  tile of all K candidate-op feature maps
    hmix_ref: VMEM [tn, td]
    """
    acc = w_ref[0] * ops_ref[0].astype(jnp.float32)
    for k in range(1, num_ops):                 # K is small & static -> unrolled
        acc = acc + w_ref[k] * ops_ref[k].astype(jnp.float32)
    hmix_ref[...] = acc.astype(hmix_ref.dtype)


def _matmul_kernel(bias_ref, mask_ref, hmix_ref, out_ref, acc_ref):
    """out_tile = mask_tile @ hmix_tile + bias, reduced over the k grid axis.

    bias_ref: SMEM [1]        sum of non-positive weights (scalar prefetch)
    mask_ref: VMEM [tm, tk]
    hmix_ref: VMEM [tk, td]
    out_ref:  VMEM [tm, td]   (f32)
    acc_ref:  VMEM [tm, td]   f32 scratch, resident across the contraction axis
    """
    k = pl.program_id(2)

    @pl.when(k == 0)
    def _():
        # Fold the scalar bias into the required accumulator init (free).
        acc_ref[...] = jnp.zeros_like(acc_ref) + bias_ref[0]

    acc_ref[...] += jnp.dot(
        mask_ref[...], hmix_ref[...], preferred_element_type=jnp.float32
    )

    @pl.when(k == pl.num_programs(2) - 1)
    def _():
        out_ref[...] = acc_ref[...].astype(out_ref.dtype)


def mixed_op_shared(mask_matrix, h_ops, weights, *, compute_dtype=None):
    """mask_matrix: [M, N], h_ops: [K, N, D], weights: [K]  ->  [M, D] float32.

    compute_dtype: optionally cast the streamed operands (e.g. jnp.bfloat16) to
    halve HBM traffic / VMEM and feed the bf16 MXU; the K-way weighted sum and
    the matmul accumulation both stay float32 (the 0/1 mask is exact in bf16).

    NOTE: like the fused formulation itself, gated-off ops (w <= 0) still
    contribute 0 * H, so non-finite values under a gated-off op give NaN here,
    whereas PyTorch skips that matmul entirely.
    """
    K, Nc, D = h_ops.shape
    M, Nc2 = mask_matrix.shape
    assert Nc2 == Nc, (mask_matrix.shape, h_ops.shape)

    if compute_dtype is None:
        op_dtype = jnp.result_type(mask_matrix.dtype, h_ops.dtype)
    else:
        op_dtype = jnp.dtype(compute_dtype)
    mask_matrix = mask_matrix.astype(op_dtype)
    h_ops = h_ops.astype(op_dtype)
    in_bytes = op_dtype.itemsize

    # Scalar preprocessing over the K weights is free in the wrapper.
    w_f32 = weights.astype(jnp.float32)
    w_pos = jnp.maximum(w_f32, 0.0)                          # gates: relu(w)
    bias = jnp.sum(jnp.minimum(w_f32, 0.0), keepdims=True)   # the "else: w" terms

    # ------------------------------------------------------------------ stage 1
    # h_mix = sum_k relu(w_k) * H_k   (reads h_ops exactly once, lane-dense store)
    tdm = _pick_tile(D, (512, 256, 128))
    tn = _pick_tile(Nc, (256, 128))
    tn = _split_if_single_point(tn, Nc, D // tdm)
    mix_footprint = 2 * K * tn * tdm * in_bytes + 2 * tn * tdm * in_bytes

    h_mix = pl.pallas_call(
        functools.partial(_mix_kernel, num_ops=K),
        out_shape=jax.ShapeDtypeStruct((Nc, D), op_dtype),
        grid_spec=pltpu.PrefetchScalarGridSpec(
            num_scalar_prefetch=1,           # relu(weights) -> SMEM
            grid=(Nc // tn, D // tdm),
            in_specs=[pl.BlockSpec((K, tn, tdm), lambda i, j, w: (0, i, j))],
            out_specs=pl.BlockSpec((tn, tdm), lambda i, j, w: (i, j)),
        ),
        compiler_params=pltpu.CompilerParams(
            dimension_semantics=("parallel", "parallel"),
            vmem_limit_bytes=_vmem_limit(mix_footprint),
        ),
    )(w_pos, h_ops)

    # ------------------------------------------------------------------ stage 2
    # out = mask @ h_mix + bias, contraction dimension tiled -> VMEM bounded at
    # O(tm*tk + tk*td) regardless of Nc, DMA overlapped with MXU along k.
    td = _pick_tile(D, (256, 128))
    tk = _pick_tile(Nc, (512, 256, 128))
    tm = _pick_tile(M, (256, 128))
    tm = _split_if_single_point(tm, M, D // td)
    mm_footprint = (2 * (tm * tk + tk * td) * in_bytes      # double-buffered inputs
                    + 2 * tm * td * 4                        # double-buffered output
                    + tm * td * 4)                           # f32 accumulator

    out = pl.pallas_call(
        _matmul_kernel,
        out_shape=jax.ShapeDtypeStruct((M, D), jnp.float32),
        grid_spec=pltpu.PrefetchScalarGridSpec(
            num_scalar_prefetch=1,           # bias -> SMEM
            grid=(M // tm, D // td, Nc // tk),
            in_specs=[
                pl.BlockSpec((tm, tk), lambda i, j, k, b: (i, k)),
                pl.BlockSpec((tk, td), lambda i, j, k, b: (k, j)),
            ],
            out_specs=pl.BlockSpec((tm, td), lambda i, j, k, b: (i, j)),
            scratch_shapes=[pltpu.VMEM((tm, td), jnp.float32)],
        ),
        compiler_params=pltpu.CompilerParams(
            dimension_semantics=("parallel", "parallel", "arbitrary"),
            vmem_limit_bytes=_vmem_limit(mm_footprint),
        ),
    )(bias, mask_matrix, h_mix)

    return out


if __name__ == "__main__":
    key = jax.random.PRNGKey(0)
    K, N, D = 5, 128, 128   # 5 candidate ops, 128 graph nodes, 128 features
    k1, k2 = jax.random.split(key, 2)

    # Sparse-ish 0/1 adjacency (the sparse operand of torch.spmm), kept dense here.
    mask = (jax.random.uniform(k1, (N, N)) < 0.1).astype(jnp.float32)
    h_ops = jax.random.normal(k2, (K, N, D), dtype=jnp.float32)
    # Positive / zero / negative architecture weights hit both branches.
    weights = jnp.array([0.6, -0.25, 0.3, 0.0, -0.1], dtype=jnp.float32)

    out = jax.block_until_ready(mixed_op_shared(mask, h_ops, weights))

    # Pure-JAX reference of the exact PyTorch semantics.
    w_pos = jnp.maximum(weights, 0.0)
    bias = jnp.sum(jnp.minimum(weights, 0.0))
    ref = jnp.einsum("k,nm,kmd->nd", w_pos, mask, h_ops) + bias

    assert out.shape == (N, D) and out.dtype == jnp.float32
    assert jnp.allclose(out, ref, atol=1e-4, rtol=1e-4), float(
        jnp.max(jnp.abs(out - ref))
    )

    # Exercise the bf16 fast path (halved HBM traffic; mix + matmul accumulate f32).
    out_bf16 = jax.block_until_ready(
        mixed_op_shared(mask, h_ops, weights, compute_dtype=jnp.bfloat16)
    )
    assert jnp.allclose(out_bf16, ref, atol=1e-1, rtol=1e-1), float(
        jnp.max(jnp.abs(out_bf16 - ref))
    )

    print("KERNEL_OK")
</pallas_src>

<mosaic_0001>
module attributes {stable_mosaic.version = 11 : i64} {
  func.func @_mix_kernel(%arg0: i32, %arg1: i32, %arg2: memref<5xf32, #tpu.memory_space<smem>>, %arg3: memref<5x64x128xf32, #tpu.memory_space<vmem>>, %arg4: memref<64x128xf32, #tpu.memory_space<vmem>>) attributes {dimension_semantics = [#tpu.dimension_semantics<parallel>, #tpu.dimension_semantics<parallel>], iteration_bounds = array<i64: 2, 1>, scalar_prefetch = 1 : i64, scratch_operands = 0 : i64, tpu.core_type = #tpu.core_type<tc>, window_params = [{transform_indices = @transform_0, window_bounds = array<i64: 5, 64, 128>}, {transform_indices = @transform_1, window_bounds = array<i64: 64, 128>}]} {
    %c0 = arith.constant 0 : index
    %0 = memref.load %arg2[%c0] : memref<5xf32, #tpu.memory_space<smem>>
    %c0_0 = arith.constant 0 : index
    %c0_1 = arith.constant 0 : index
    %c0_2 = arith.constant 0 : index
    %1 = vector.load %arg3[%c0_0, %c0_1, %c0_2] : memref<5x64x128xf32, #tpu.memory_space<vmem>>, vector<1x64x128xf32>
    %2 = vector.shape_cast %1 : vector<1x64x128xf32> to vector<64x128xf32>
    %3 = vector.broadcast %0 : f32 to vector<64x128xf32>
    %4 = arith.mulf %3, %2 : vector<64x128xf32>
    %c1 = arith.constant 1 : index
    %5 = memref.load %arg2[%c1] : memref<5xf32, #tpu.memory_space<smem>>
    %c1_3 = arith.constant 1 : index
    %c0_4 = arith.constant 0 : index
    %c0_5 = arith.constant 0 : index
    %6 = vector.load %arg3[%c1_3, %c0_4, %c0_5] : memref<5x64x128xf32, #tpu.memory_space<vmem>>, vector<1x64x128xf32>
    %7 = vector.shape_cast %6 : vector<1x64x128xf32> to vector<64x128xf32>
    %8 = vector.broadcast %5 : f32 to vector<64x128xf32>
    %9 = arith.mulf %8, %7 : vector<64x128xf32>
    %10 = arith.addf %4, %9 : vector<64x128xf32>
    %c2 = arith.constant 2 : index
    %11 = memref.load %arg2[%c2] : memref<5xf32, #tpu.memory_space<smem>>
    %c2_6 = arith.constant 2 : index
    %c0_7 = arith.constant 0 : index
    %c0_8 = arith.constant 0 : index
    %12 = vector.load %arg3[%c2_6, %c0_7, %c0_8] : memref<5x64x128xf32, #tpu.memory_space<vmem>>, vector<1x64x128xf32>
    %13 = vector.shape_cast %12 : vector<1x64x128xf32> to vector<64x128xf32>
    %14 = vector.broadcast %11 : f32 to vector<64x128xf32>
    %15 = arith.mulf %14, %13 : vector<64x128xf32>
    %16 = arith.addf %10, %15 : vector<64x128xf32>
    %c3 = arith.constant 3 : index
    %17 = memref.load %arg2[%c3] : memref<5xf32, #tpu.memory_space<smem>>
    %c3_9 = arith.constant 3 : index
    %c0_10 = arith.constant 0 : index
    %c0_11 = arith.constant 0 : index
    %18 = vector.load %arg3[%c3_9, %c0_10, %c0_11] : memref<5x64x128xf32, #tpu.memory_space<vmem>>, vector<1x64x128xf32>
    %19 = vector.shape_cast %18 : vector<1x64x128xf32> to vector<64x128xf32>
    %20 = vector.broadcast %17 : f32 to vector<64x128xf32>
    %21 = arith.mulf %20, %19 : vector<64x128xf32>
    %22 = arith.addf %16, %21 : vector<64x128xf32>
    %c4 = arith.constant 4 : index
    %23 = memref.load %arg2[%c4] : memref<5xf32, #tpu.memory_space<smem>>
    %c4_12 = arith.constant 4 : index
    %c0_13 = arith.constant 0 : index
    %c0_14 = arith.constant 0 : index
    %24 = vector.load %arg3[%c4_12, %c0_13, %c0_14] : memref<5x64x128xf32, #tpu.memory_space<vmem>>, vector<1x64x128xf32>
    %25 = vector.shape_cast %24 : vector<1x64x128xf32> to vector<64x128xf32>
    %26 = vector.broadcast %23 : f32 to vector<64x128xf32>
    %27 = arith.mulf %26, %25 : vector<64x128xf32>
    %28 = arith.addf %22, %27 : vector<64x128xf32>
    %c0_15 = arith.constant 0 : index
    %c0_16 = arith.constant 0 : index
    %29 = vector.load %arg4[%c0_15, %c0_16] : memref<64x128xf32, #tpu.memory_space<vmem>>, vector<64x128xf32>
    tpu.vector_store %arg4[%c0_15, %c0_16], %28 {strides = array<i32>} : memref<64x128xf32, #tpu.memory_space<vmem>>, vector<64x128xf32>,
    return
  }
  func.func @transform_0(%arg0: i32, %arg1: i32, %arg2: memref<5xf32, #tpu.memory_space<smem>>) -> (i32, i32, i32) {
    %c0_i32 = arith.constant 0 : i32
    %c0_i32_0 = arith.constant 0 : i32
    return %c0_i32, %arg0, %arg1 : i32, i32, i32
  }
  func.func @transform_1(%arg0: i32, %arg1: i32, %arg2: memref<5xf32, #tpu.memory_space<smem>>) -> (i32, i32) {
    %c0_i32 = arith.constant 0 : i32
    return %arg0, %arg1 : i32, i32
  }
}

</mosaic_0001>

<llo_original>
// kernel: tpu_custom_call.1
$region0: #{tpu_custom_call.1}
  #allocation0 [shape = 'u32[]', space=smem, size = 0x4, offset = 0x4, fixed_abs, tag = 'smem constant byte address 0x4 - core index']
  #allocation1 [shape = 'u32[144,128]{1,0:T(1,128)}', space=vmem, size = 0x12000, scoped, tag = 'internal scratch']
  #allocation2 [shape = 's32[1]{0}', space=sflag, size = 0x4, scoped, tag = 'scoped memory for tpu_custom_call.1']
  #allocation3 [shape = 'u8[512]{0}', space=smem, size = 0x200, scoped, tag = 'prefetched SMEM operand 0']
  #allocation8 [shape = 's32[]', space=sflag, size = 0x4, offset = 0, fixed_abs, tag = 'sflag constant byte address 0x0 - dummy sync flag']
  %s0 = inlined_call_operand.hbm [shape: f32[5], index: 0, kind: input, shape index: {}]
  %s1 = inlined_call_operand.hbm [shape: f32[5,128,128], index: 1, kind: input, shape index: {}]
  %s2 = inlined_call_operand.hbm [shape: f32[128,128], index: 2, kind: output, shape index: {}]
  %s3 = sld [smem:[#allocation0]]
  $region41: #{tpu_custom_call.1} parent=0
    _
  %s5 = ssub.s32 1, %s3
  %s6 = scalar_select 0, %s5, %s3
  %8 = dma.hbm_to_smem %s0, 16, [#allocation3], [#allocation2]
  %9 = dma.done [#allocation2], 16
  %10 = sfence
  $region1: #{tpu_custom_call.1} parent=0
    #allocation4 [shape = 'u8[327680]{0}', space=vmem, size = 0x50000, scoped, tag = 'input window, operand 1']
    #allocation5 [shape = 's32[2]{0}', space=sflag, size = 0x8, scoped, tag = 'scoped memory for tpu_custom_call.1']
    #allocation6 [shape = 's32[2]{0}', space=sflag, size = 0x8, scoped, tag = 'scoped memory for tpu_custom_call.1']
    #allocation7 [shape = 'u8[65536]{0}', space=vmem, size = 0x10000, scoped, tag = 'output window, operand 0']
    %11 = vsyncpa [#allocation5], 0
    %s12 = scalar_lea.sflag [#allocation5], 1
    %13 = vsyncpa %s12, 0
    %14 = vsyncpa [#allocation6], 0
    %s15 = scalar_lea.sflag [#allocation6], 1
    %16 = vsyncpa %s15, 0
    loop: start=0, step=1, limit=4
    $region2: #{tpu_custom_call.1} parent=1 // loop_pre_header
      _
    $region3: #{tpu_custom_call.1} parent=1 // loop_header
      %s18 = sphi 0, %s22
      %p19 = scmp.ge.s32.totalorder %s18, 4
      %s25 = sphi 0, %s37
      %s26 = sphi 0, %s33
      %s27 = sphi 0, %s25
      %s28 = sphi 0, %s26
      %s29 = sphi 0, %s27
      %s30 = sphi 0, %s28
      %s42 = sphi 0, %s44
      %s45 = sphi 0, %s42
      %s46 = sphi 0, %s45
      %s62 = sphi 0, %s46
      %s70 = sphi 0, %s72
      %s73 = sphi 0, %s70
      %s74 = sphi 0, %s73
      %s90 = sphi 0, %s74
    $region4: #{tpu_custom_call.1} parent=1 // loop_header_branch
      %21 = sbr.rel (%p19) target = $region8
    $region5: #{tpu_custom_call.1} parent=1 // loop_body
      %s23 = ssub.s32 %s18, 1
      %s24 = ssub.s32 %s18, 2
      %s31 = sadd.s32 1, %s26
      %p32 = scmp.ge.s32.totalorder %s31, 1
      %s33 = scalar_select %p32, 0, %s31
      %s34 = sadd.s32 1, %s25
      %s35 = scalar_select %p32, %s34, %s25
      %p36 = scmp.ge.s32.totalorder %s35, 2
      %s37 = scalar_select %p36, 0, %s35
      %s38 = ssub.s32 %s25, %s37
      %s39 = ssub.s32 %s26, %s33
      %s40 = sor.u32 %s38, %s39
      %p41 = scmp.eq.s32.totalorder %s40, 0
      %s43 = sadd.s32 %s42, 1
      %s44 = scalar_select %p41, %s42, %s43
      %p47 = pneg %p41
      %p48 = scmp.eq.s32.totalorder %s18, 1
      %p49 = por %p47, %p48
      %p50 = scmp.ne.s32.totalorder %s42, %s45
      %p51 = scmp.eq.s32.totalorder %s18, 0
      %p52 = por %p50, %p51
      %p53 = scmp.ne.s32.totalorder %s42, %s45
      %p54 = scmp.eq.s32.totalorder %s23, 1
      %p55 = por %p53, %p54
      %p56 = scmp.ne.s32.totalorder %s45, %s46
      %p57 = scmp.eq.s32.totalorder %s23, 0
      %p58 = por %p56, %p57
      %p59 = scmp.ne.s32.totalorder %s45, %s46
      %p60 = scmp.eq.s32.totalorder %s24, 1
      %p61 = por %p59, %p60
      %p63 = scmp.ne.s32.totalorder %s46, %s62
      %p64 = scmp.eq.s32.totalorder %s24, 0
      %p65 = por %p63, %p64
      %s66 = ssub.s32 %s25, %s37
      %s67 = ssub.s32 %s26, %s33
      %s68 = sor.u32 %s66, %s67
      %p69 = scmp.eq.s32.totalorder %s68, 0
      %s71 = sadd.s32 %s70, 1
      %s72 = scalar_select %p69, %s70, %s71
      %p75 = pneg %p69
      %p76 = scmp.eq.s32.totalorder %s18, 1
      %p77 = por %p75, %p76
      %p78 = scmp.ne.s32.totalorder %s70, %s73
      %p79 = scmp.eq.s32.totalorder %s18, 0
      %p80 = por %p78, %p79
      %p81 = scmp.ne.s32.totalorder %s70, %s73
      %p82 = scmp.eq.s32.totalorder %s23, 1
      %p83 = por %p81, %p82
      %p84 = scmp.ne.s32.totalorder %s73, %s74
      %p85 = scmp.eq.s32.totalorder %s23, 0
      %p86 = por %p84, %p85
      %p87 = scmp.ne.s32.totalorder %s73, %s74
      %p88 = scmp.eq.s32.totalorder %s24, 1
      %p89 = por %p87, %p88
      %p91 = scmp.ne.s32.totalorder %s74, %s90
      %p92 = scmp.eq.s32.totalorder %s24, 0
      %p93 = por %p91, %p92
      %p94 = scmp.le.s32.totalorder 1, %s18
      %p95 = scmp.lt.s32.totalorder %s18, 3
      %p96 = pnand %p94, %p95
      %p97 = pneg %p96
      // Predicated region
      $region9: #{tpu_custom_call.1} parent=5 // pred_check
        _
      $region10: #{tpu_custom_call.1} parent=5 // pred_check_branch
        %99 = sbr.rel (%p96) target = $region12
      $region11: #{tpu_custom_call.1} parent=5 // pred_region
        %s100 = ssub.s32 %s18, 1
      $region12: #{tpu_custom_call.1} parent=5 // pred_fallthru
        _
      %p101 = scmp.lt.s32.totalorder %s18, 2
      // Predicated region
      $region13: #{tpu_custom_call.1} parent=5 // pred_check
        %p102 = pneg %p101
      $region14: #{tpu_custom_call.1} parent=5 // pred_check_branch
        %104 = sbr.rel (%p102) target = $region16
      $region15: #{tpu_custom_call.1} parent=5 // pred_region
        // Predicated region
        $region17: #{tpu_custom_call.1} parent=15 // pred_check
          %p105 = pneg %p52
        $region18: #{tpu_custom_call.1} parent=15 // pred_check_branch
          %107 = sbr.rel (%p105) target = $region20
        $region19: #{tpu_custom_call.1} parent=15 // pred_region
          #allocation9 [shape = 'u32[6]{0}', space=smem, size = 0x18, scoped, tag = 'DMA stride descriptor']
          %s108 = sand.u32 %s42, 1
          %s109 = scalar_lea.sflag [#allocation5], %s108
          %s110 = sand.u32 %s42, 1
          %s111 = smul.addr %s110, 320
          %s112 = scalar_lea.vmem [#allocation4], %s111
          %s113 = smul.u32 8, %s25
          %s115 = ssub.s32 5120, 5120
          %116 = vsyncadd %s109, %s115
          %s117 = sadd.s32 %s26, %s113
          %s118 = smul.addr %s117, 128
          %s119 = scalar_lea.hbm %s1, %s118
          %s121 = sshll.u32 1, 14
          %s122 = sxor.u32 4294967295, %s121
          %s124 = sld [smem:[#allocation0]]
          %s125 = sadd.s32 2, %s124
          %s127 = sshll.u32 7, 26
          %s128 = sxor.u32 4294967295, %s127
          %s129 = sand.u32 0, %s128
          %s130 = sshll.u32 %s125, 26
          %s131 = sor.u32 %s129, %s130
          %s132 = sshll.u32 %s112, 4
          %s133 = int_to_ptr.vmem [resolvable:$true] %s132
          %139 = sst [smem:[#allocation9]] 2048
          %s140 = scalar_lea.smem [#allocation9], 1
          %141 = sst [smem:[%s140]] 1024
          %s142 = scalar_lea.smem [#allocation9], 2
          %143 = sst [smem:[%s142]] 8
          %s144 = scalar_lea.smem [#allocation9], 3
          %145 = sst [smem:[%s144]] 128
          %s146 = scalar_lea.smem [#allocation9], 4
          %147 = sst [smem:[%s146]] 128
          %s148 = scalar_lea.smem [#allocation9], 5
          %149 = sst [smem:[%s148]] 8
          %151 = dma.general %s119, 5120, %s133, %s109, [#allocation8], [#allocation9], %s131, 0
        $region20: #{tpu_custom_call.1} parent=15 // pred_fallthru
          _
      $region16: #{tpu_custom_call.1} parent=5 // pred_fallthru
        _
      %p152 = scmp.le.s32.totalorder 1, %s18
      %p153 = scmp.lt.s32.totalorder %s18, 3
      %p154 = pnand %p152, %p153
      %p155 = pneg %p154
      // Predicated region
      $region21: #{tpu_custom_call.1} parent=5 // pred_check
        _
      $region22: #{tpu_custom_call.1} parent=5 // pred_check_branch
        %157 = sbr.rel (%p154) target = $region24
      $region23: #{tpu_custom_call.1} parent=5 // pred_region
        %s158 = ssub.s32 %s18, 1
        %s159 = sand.u32 %s45, 1
        %s160 = scalar_lea.sflag [#allocation5], %s159
        %s161 = sand.u32 %s45, 1
        %s162 = smul.addr %s161, 320
        %s163 = scalar_lea.vmem [#allocation4], %s162
        // Predicated region
        $region25: #{tpu_custom_call.1} parent=23 // pred_check
          %p164 = pneg %p58
        $region26: #{tpu_custom_call.1} parent=23 // pred_check_branch
          %166 = sbr.rel (%p164) target = $region28
        $region27: #{tpu_custom_call.1} parent=23 // pred_region
          %167 = dma.done %s160, 5120
        $region28: #{tpu_custom_call.1} parent=23 // pred_fallthru
          _
        %s168 = sand.u32 %s45, 1
        %s169 = scalar_lea.sflag [#allocation5], %s168
        %s170 = sand.u32 %s45, 1
        %s171 = smul.addr %s170, 320
        %s172 = scalar_lea.vmem [#allocation4], %s171
        %p173 = pneg %p58
        %p174 = pneg %p55
        %p175 = pneg %p86
        %p176 = pneg %p83
        %s177 = sand.u32 %s73, 1
        %s178 = scalar_lea.sflag [#allocation6], %s177
        %s179 = sand.u32 %s73, 1
        %s180 = smul.addr %s179, 64
        %s181 = scalar_lea.vmem [#allocation7], %s180
        %s182 = smul.u32 8, %s27
        %s183 = smul.u32 8, %s27
        %s184 = sld [smem:[#allocation3]]
        %v185 = vld [vmem:[%s163] sm:$0xff]
        %v186 = vld [vmem:[%s163 + $0x8] sm:$0xff]
        %v187 = vld [vmem:[%s163 + $0x10] sm:$0xff]
        %v188 = vld [vmem:[%s163 + $0x18] sm:$0xff]
        %v189 = vld [vmem:[%s163 + $0x20] sm:$0xff]
        %v190 = vld [vmem:[%s163 + $0x28] sm:$0xff]
        %v191 = vld [vmem:[%s163 + $0x30] sm:$0xff]
        %v192 = vld [vmem:[%s163 + $0x38] sm:$0xff]
        %v193 = vstv %s184
        %v194 = vmul.f32 %v193, %v185
        %v195 = vmul.f32 %v193, %v186
        %v196 = vmul.f32 %v193, %v187
        %v197 = vmul.f32 %v193, %v188
        %v198 = vmul.f32 %v193, %v189
        %v199 = vmul.f32 %v193, %v190
        %v200 = vmul.f32 %v193, %v191
        %v201 = vmul.f32 %v193, %v192
        %s202 = sld [smem:[#allocation3 + $0x1]]
        %s203 = scalar_lea.vmem %s163, 64 [#allocation4]
        %v204 = vld [vmem:[%s203] sm:$0xff]
        %v205 = vld [vmem:[%s203 + $0x8] sm:$0xff]
        %v206 = vld [vmem:[%s203 + $0x10] sm:$0xff]
        %v207 = vld [vmem:[%s203 + $0x18] sm:$0xff]
        %v208 = vld [vmem:[%s203 + $0x20] sm:$0xff]
        %v209 = vld [vmem:[%s203 + $0x28] sm:$0xff]
        %v210 = vld [vmem:[%s203 + $0x30] sm:$0xff]
        %v211 = vld [vmem:[%s203 + $0x38] sm:$0xff]
        %v212 = vstv %s202
        %v213 = vmul.f32 %v212, %v204
        %v214 = vmul.f32 %v212, %v205
        %v215 = vmul.f32 %v212, %v206
        %v216 = vmul.f32 %v212, %v207
        %v217 = vmul.f32 %v212, %v208
        %v218 = vmul.f32 %v212, %v209
        %v219 = vmul.f32 %v212, %v210
        %v220 = vmul.f32 %v212, %v211
        %v221 = vadd.f32 %v194, %v213
        %v222 = vadd.f32 %v195, %v214
        %v223 = vadd.f32 %v196, %v215
        %v224 = vadd.f32 %v197, %v216
        %v225 = vadd.f32 %v198, %v217
        %v226 = vadd.f32 %v199, %v218
        %v227 = vadd.f32 %v200, %v219
        %v228 = vadd.f32 %v201, %v220
        %s229 = sld [smem:[#allocation3 + $0x2]]
        %s230 = scalar_lea.vmem %s163, 128 [#allocation4]
        %v231 = vld [vmem:[%s230] sm:$0xff]
        %v232 = vld [vmem:[%s230 + $0x8] sm:$0xff]
        %v233 = vld [vmem:[%s230 + $0x10] sm:$0xff]
        %v234 = vld [vmem:[%s230 + $0x18] sm:$0xff]
        %v235 = vld [vmem:[%s230 + $0x20] sm:$0xff]
        %v236 = vld [vmem:[%s230 + $0x28] sm:$0xff]
        %v237 = vld [vmem:[%s230 + $0x30] sm:$0xff]
        %v238 = vld [vmem:[%s230 + $0x38] sm:$0xff]
        %v239 = vstv %s229
        %v240 = vmul.f32 %v239, %v231
        %v241 = vmul.f32 %v239, %v232
        %v242 = vmul.f32 %v239, %v233
        %v243 = vmul.f32 %v239, %v234
        %v244 = vmul.f32 %v239, %v235
        %v245 = vmul.f32 %v239, %v236
        %v246 = vmul.f32 %v239, %v237
        %v247 = vmul.f32 %v239, %v238
        %v248 = vadd.f32 %v221, %v240
        %v249 = vadd.f32 %v222, %v241
        %v250 = vadd.f32 %v223, %v242
        %v251 = vadd.f32 %v224, %v243
        %v252 = vadd.f32 %v225, %v244
        %v253 = vadd.f32 %v226, %v245
        %v254 = vadd.f32 %v227, %v246
        %v255 = vadd.f32 %v228, %v247
        %s256 = sld [smem:[#allocation3 + $0x3]]
        %s257 = scalar_lea.vmem %s163, 192 [#allocation4]
        %v258 = vld [vmem:[%s257] sm:$0xff]
        %v259 = vld [vmem:[%s257 + $0x8] sm:$0xff]
        %v260 = vld [vmem:[%s257 + $0x10] sm:$0xff]
        %v261 = vld [vmem:[%s257 + $0x18] sm:$0xff]
        %v262 = vld [vmem:[%s257 + $0x20] sm:$0xff]
        %v263 = vld [vmem:[%s257 + $0x28] sm:$0xff]
        %v264 = vld [vmem:[%s257 + $0x30] sm:$0xff]
        %v265 = vld [vmem:[%s257 + $0x38] sm:$0xff]
        %v266 = vstv %s256
        %v267 = vmul.f32 %v266, %v258
        %v268 = vmul.f32 %v266, %v259
        %v269 = vmul.f32 %v266, %v260
        %v270 = vmul.f32 %v266, %v261
        %v271 = vmul.f32 %v266, %v262
        %v272 = vmul.f32 %v266, %v263
        %v273 = vmul.f32 %v266, %v264
        %v274 = vmul.f32 %v266, %v265
        %v275 = vadd.f32 %v248, %v267
        %v276 = vadd.f32 %v249, %v268
        %v277 = vadd.f32 %v250, %v269
        %v278 = vadd.f32 %v251, %v270
        %v279 = vadd.f32 %v252, %v271
        %v280 = vadd.f32 %v253, %v272
        %v281 = vadd.f32 %v254, %v273
        %v282 = vadd.f32 %v255, %v274
        %s283 = sld [smem:[#allocation3 + $0x4]]
        %s284 = scalar_lea.vmem %s163, 256 [#allocation4]
        %v285 = vld [vmem:[%s284] sm:$0xff]
        %v286 = vld [vmem:[%s284 + $0x8] sm:$0xff]
        %v287 = vld [vmem:[%s284 + $0x10] sm:$0xff]
        %v288 = vld [vmem:[%s284 + $0x18] sm:$0xff]
        %v289 = vld [vmem:[%s284 + $0x20] sm:$0xff]
        %v290 = vld [vmem:[%s284 + $0x28] sm:$0xff]
        %v291 = vld [vmem:[%s284 + $0x30] sm:$0xff]
        %v292 = vld [vmem:[%s284 + $0x38] sm:$0xff]
        %v293 = vstv %s283
        %v294 = vmul.f32 %v293, %v285
        %v295 = vmul.f32 %v293, %v286
        %v296 = vmul.f32 %v293, %v287
        %v297 = vmul.f32 %v293, %v288
        %v298 = vmul.f32 %v293, %v289
        %v299 = vmul.f32 %v293, %v290
        %v300 = vmul.f32 %v293, %v291
        %v301 = vmul.f32 %v293, %v292
        %v302 = vadd.f32 %v275, %v294
        %v303 = vadd.f32 %v276, %v295
        %v304 = vadd.f32 %v277, %v296
        %v305 = vadd.f32 %v278, %v297
        %v306 = vadd.f32 %v279, %v298
        %v307 = vadd.f32 %v280, %v299
        %v308 = vadd.f32 %v281, %v300
        %v309 = vadd.f32 %v282, %v301
        %310 = vst [vmem:[%s181] sm:$0xff] %v302
        %311 = vst [vmem:[%s181 + $0x8] sm:$0xff] %v303
        %312 = vst [vmem:[%s181 + $0x10] sm:$0xff] %v304
        %313 = vst [vmem:[%s181 + $0x18] sm:$0xff] %v305
        %314 = vst [vmem:[%s181 + $0x20] sm:$0xff] %v306
        %315 = vst [vmem:[%s181 + $0x28] sm:$0xff] %v307
        %316 = vst [vmem:[%s181 + $0x30] sm:$0xff] %v308
        %317 = vst [vmem:[%s181 + $0x38] sm:$0xff] %v309
        %s318 = sand.u32 %s73, 1
        %s319 = scalar_lea.sflag [#allocation6], %s318
        %s320 = sand.u32 %s73, 1
        %s321 = smul.addr %s320, 64
        %s322 = scalar_lea.vmem [#allocation7], %s321
        // Predicated region
        $region29: #{tpu_custom_call.1} parent=23 // pred_check
          %p323 = pneg %p83
        $region30: #{tpu_custom_call.1} parent=23 // pred_check_branch
          %325 = sbr.rel (%p323) target = $region32
        $region31: #{tpu_custom_call.1} parent=23 // pred_region
          %s326 = smul.u32 8, %s27
          %s328 = ssub.s32 1024, 1024
          %329 = vsyncadd %s319, %s328
          %s330 = sadd.s32 %s28, %s326
          %s331 = smul.addr %s330, 128
          %s332 = scalar_lea.hbm %s2, %s331
          %s333 = sshll.u32 %s322, 4
          %s334 = int_to_ptr.vmem [resolvable:$true] %s333
          %339 = dma.vmem_to_hbm [thread:$0]  %s334, 1024, %s332, %s319, 128, 128, 8
        $region32: #{tpu_custom_call.1} parent=23 // pred_fallthru
          _
      $region24: #{tpu_custom_call.1} parent=5 // pred_fallthru
        _
      %p340 = scmp.le.s32.totalorder 2, %s18
      // Predicated region
      $region33: #{tpu_custom_call.1} parent=5 // pred_check
        %p341 = pneg %p340
      $region34: #{tpu_custom_call.1} parent=5 // pred_check_branch
        %343 = sbr.rel (%p341) target = $region36
      $region35: #{tpu_custom_call.1} parent=5 // pred_region
        %s344 = ssub.s32 %s18, 2
        // Predicated region
        $region37: #{tpu_custom_call.1} parent=35 // pred_check
          %p345 = pneg %p89
        $region38: #{tpu_custom_call.1} parent=35 // pred_check_branch
          %347 = sbr.rel (%p345) target = $region40
        $region39: #{tpu_custom_call.1} parent=35 // pred_region
          %s348 = sand.u32 %s74, 1
          %s349 = scalar_lea.sflag [#allocation6], %s348
          %s350 = sand.u32 %s74, 1
          %s351 = smul.addr %s350, 64
          %s352 = scalar_lea.vmem [#allocation7], %s351
          %353 = dma.done %s349, 1024
        $region40: #{tpu_custom_call.1} parent=35 // pred_fallthru
          _
      $region36: #{tpu_custom_call.1} parent=5 // pred_fallthru
        _
    $region6: #{tpu_custom_call.1} parent=1 // loop_footer
      %s22 = sadd.s32 1, %s18
    $region7: #{tpu_custom_call.1} parent=1 // loop_footer_branch
      %17 = sbr.rel target = $region3
    $region8: #{tpu_custom_call.1} parent=1 // loop_exit
      _
    %354 = vsyncpa [#allocation5], 1
    %s355 = scalar_lea.sflag [#allocation5], 1
    %356 = vsyncpa %s355, 1
    %357 = vsyncpa [#allocation6], 1
    %s358 = scalar_lea.sflag [#allocation6], 1
    %359 = vsyncpa %s358, 1

</llo_original>
